<compile_context>
chip_gen: v7x
topology: tpu7x:2x2x1
jax: 0.10.0
libtpu: 0.0.40
codegen_flags: <defaults>
</compile_context>

<pallas_src>
import functools

import jax
import jax.numpy as jnp
import numpy as np
from jax.experimental import pallas as pl
from jax.experimental.pallas import tpu as pltpu

NEG_SLOPE = 0.2
IN_EPS = 1e-5
_VMEM_BUDGET = 12 * 1024 * 1024     # per-step buffer budget (double-buffered), v7x-safe
_VMEM_LIMIT = 32 * 1024 * 1024      # scoped VMEM limit passed to the compiler


def _leaky(v):
    return jnp.where(v >= 0, v, NEG_SLOPE * v)


def _round_up(x, m):
    return (x + m - 1) // m * m


# ---------------------------------------------------------------------------
# Kernel 1: 3x3 conv as a single MXU matmul over the tap-folded contraction dim.
# ---------------------------------------------------------------------------
def _conv_kernel(w_ref, x_ref, o_ref, *, leaky):
    y = jnp.dot(w_ref[...], x_ref[0], preferred_element_type=jnp.float32)
    if leaky:
        y = _leaky(y)
    o_ref[0] = y.astype(o_ref.dtype)


def _conv_res_kernel(w_ref, x_ref, r_ref, o_ref, *, leaky):
    y = jnp.dot(w_ref[...], x_ref[0], preferred_element_type=jnp.float32)
    if leaky:
        y = _leaky(y)
    o_ref[0] = (y + r_ref[0].astype(jnp.float32)).astype(o_ref.dtype)


def _pick_pixel_tile(Pp, bytes_per_lane, budget=_VMEM_BUDGET):
    """Largest multiple-of-128 divisor of Pp whose per-step buffers fit the budget."""
    cap = max(128, (budget // bytes_per_lane) // 128 * 128)
    cap = min(cap, Pp)
    for cand in range(cap, 127, -128):
        if Pp % cand == 0:
            return cand
    return min(Pp, 128)  # unreachable: Pp is a multiple of 128 by construction


def conv3x3_folded(x_slab, w_folded, residual=None, *, leaky=False):
    """3x3/pad-1 conv with the 9 taps folded into the contraction dim.

    x_slab:   (N, 9*Cin, Pp) tap-major im2col slab (Pp % 128 == 0, zero tail)
    w_folded: (Cout, 9*Cin)
    residual: optional (N, Cout, Pp), added after the (optional) LeakyReLU
    returns:  (N, Cout, Pp)
    """
    N, K9, Pp = x_slab.shape
    Cout = w_folded.shape[0]

    bytes_per_lane = 4 * (2 * K9 + 2 * Cout + (2 * Cout if residual is not None else 0))
    tp = _pick_pixel_tile(Pp, bytes_per_lane)
    grid = (N, Pp // tp)

    in_specs = [
        pl.BlockSpec((Cout, K9), lambda n, p: (0, 0)),      # resident weight block
        pl.BlockSpec((1, K9, tp), lambda n, p: (n, 0, p)),
    ]
    args = [w_folded, x_slab]
    if residual is None:
        kernel = functools.partial(_conv_kernel, leaky=leaky)
    else:
        kernel = functools.partial(_conv_res_kernel, leaky=leaky)
        in_specs.append(pl.BlockSpec((1, Cout, tp), lambda n, p: (n, 0, p)))
        args.append(residual)

    return pl.pallas_call(
        kernel,
        out_shape=jax.ShapeDtypeStruct((N, Cout, Pp), x_slab.dtype),
        grid=grid,
        in_specs=in_specs,
        out_specs=pl.BlockSpec((1, Cout, tp), lambda n, p: (n, 0, p)),
        compiler_params=pltpu.CompilerParams(
            dimension_semantics=("parallel", "parallel"),
            vmem_limit_bytes=_VMEM_LIMIT),
    )(*args)


# ---------------------------------------------------------------------------
# Kernel 2: fused InstanceNorm2d + (1+gamma)*. + beta + LeakyReLU(0.2),
# channel-group tiled (stats are per-channel, so the tiling is exact).
# ---------------------------------------------------------------------------
def _csain_leaky_kernel(x_ref, g_ref, b_ref, o_ref, *, inv_count):
    x = x_ref[0].astype(jnp.float32)                       # (tc, Pp)
    s = jnp.sum(x, axis=1, keepdims=True)
    s2 = jnp.sum(x * x, axis=1, keepdims=True)
    mean = s * inv_count                                   # true pixel count (zero tail)
    var = jnp.maximum(s2 * inv_count - mean * mean, 0.0)   # biased var (PyTorch)
    xn = (x - mean) * jax.lax.rsqrt(var + IN_EPS)
    y = (1.0 + g_ref[0, 0].astype(jnp.float32)) * xn + b_ref[0, 0].astype(jnp.float32)
    o_ref[0] = _leaky(y).astype(o_ref.dtype)


def _pick_channel_tile(C, Pp, budget=_VMEM_BUDGET):
    """Largest divisor of C (multiple of 8, or C itself) whose blocks fit the budget."""
    cands = [tc for tc in range(C, 0, -1)
             if C % tc == 0 and (tc % 8 == 0 or tc == C)]
    for tc in cands:
        if 8 * tc * Pp * 4 <= budget:          # x,g,b,out blocks, double-buffered
            return tc
    return cands[-1]


def csain_leaky(x_pp, gb, g_idx, b_idx, pixel_count):
    """x_pp: (N, C, Pp); gb: (N, 4, C, Pp) stacked [g1, b1, g2, b2] generator outputs."""
    N, C, Pp = x_pp.shape
    tc = _pick_channel_tile(C, Pp)
    kernel = functools.partial(_csain_leaky_kernel, inv_count=1.0 / pixel_count)
    return pl.pallas_call(
        kernel,
        out_shape=jax.ShapeDtypeStruct((N, C, Pp), x_pp.dtype),
        grid=(N, C // tc),
        in_specs=[
            pl.BlockSpec((1, tc, Pp), lambda n, c: (n, c, 0)),
            pl.BlockSpec((1, 1, tc, Pp), lambda n, c: (n, g_idx, c, 0)),
            pl.BlockSpec((1, 1, tc, Pp), lambda n, c: (n, b_idx, c, 0)),
        ],
        out_specs=pl.BlockSpec((1, tc, Pp), lambda n, c: (n, c, 0)),
        compiler_params=pltpu.CompilerParams(
            dimension_semantics=("parallel", "parallel"),
            vmem_limit_bytes=_VMEM_LIMIT),
    )(x_pp, gb, gb)


# ---------------------------------------------------------------------------
# Wrapper-side layout plumbing (XLA): pad / tap-folded slab / weight folding.
# ---------------------------------------------------------------------------
def _im2col_folded(x, Pp):
    """(N, C, H, W) -> (N, 9*C, Pp) tap-major slab; row index = tap*C + c; zero tail."""
    N, C, H, W = x.shape
    P = H * W
    xp = jnp.pad(x, ((0, 0), (0, 0), (1, 1), (1, 1)))
    taps = [xp[:, :, dy:dy + H, dx:dx + W].reshape(N, C, P)
            for dy in range(3) for dx in range(3)]
    slab = jnp.concatenate(taps, axis=1)
    if Pp > P:
        slab = jnp.pad(slab, ((0, 0), (0, 0), (0, Pp - P)))
    return slab


def _fold_w(w):
    """(Cout, Cin, 3, 3) -> (Cout, 9*Cin); column index = (ky*3+kx)*Cin + ci."""
    Cout, Cin = w.shape[:2]
    return jnp.transpose(w, (0, 2, 3, 1)).reshape(Cout, 9 * Cin)


def preact_block_csain(x, reg_matrix, Wg1, Wb1, Wc1, Wg2, Wb2, Wc2):
    """Pallas TPU equivalent of PreActBlock_CSAIN.forward (identity shortcut)."""
    N, C, H, W = x.shape
    P = H * W
    Pp = _round_up(P, 128)

    x_pp = x.reshape(N, C, P)
    if Pp > P:
        x_pp = jnp.pad(x_pp, ((0, 0), (0, 0), (0, Pp - P)))

    # Gamma/beta generators: one fused conv over reg with 4C output channels,
    # LeakyReLU fused in-kernel. gb planes: [gamma1, beta1, gamma2, beta2].
    reg_slab = _im2col_folded(reg_matrix, Pp)
    w_gb = jnp.concatenate([_fold_w(Wg1), _fold_w(Wb1),
                            _fold_w(Wg2), _fold_w(Wb2)], axis=0)
    gb = conv3x3_folded(reg_slab, w_gb, leaky=True).reshape(N, 4, C, Pp)

    # CSAIN #1 (+ outer LeakyReLU)
    t1 = csain_leaky(x_pp, gb, 0, 1, P)

    # conv1
    t1_img = t1[:, :, :P].reshape(N, C, H, W)
    h1 = conv3x3_folded(_im2col_folded(t1_img, Pp), _fold_w(Wc1))

    # CSAIN #2 (+ outer LeakyReLU)
    t2 = csain_leaky(h1, gb, 2, 3, P)

    # conv2 + identity shortcut (fused residual add in-kernel)
    t2_img = t2[:, :, :P].reshape(N, C, H, W)
    out = conv3x3_folded(_im2col_folded(t2_img, Pp), _fold_w(Wc2), residual=x_pp)
    return out[:, :, :P].reshape(N, C, H, W)


# ---------------------------------------------------------------------------
# Pure-JAX reference for verification.
# ---------------------------------------------------------------------------
def _conv3x3_ref(x, w):
    return jax.lax.conv_general_dilated(
        x, w, window_strides=(1, 1), padding=((1, 1), (1, 1)),
        dimension_numbers=("NCHW", "OIHW", "NCHW"))


def _instance_norm_ref(x, eps=IN_EPS):
    mean = x.mean(axis=(2, 3), keepdims=True)
    var = ((x - mean) ** 2).mean(axis=(2, 3), keepdims=True)
    return (x - mean) * jax.lax.rsqrt(var + eps)


def _csain_ref(x, reg, wg, wb):
    gamma = _leaky(_conv3x3_ref(reg, wg))
    beta = _leaky(_conv3x3_ref(reg, wb))
    return (1.0 + gamma) * _instance_norm_ref(x) + beta


def _preact_ref(x, reg, Wg1, Wb1, Wc1, Wg2, Wb2, Wc2):
    out = _leaky(_csain_ref(x, reg, Wg1, Wb1))
    shortcut = x  # stride == 1 and in_planes == planes -> identity shortcut
    out = _conv3x3_ref(out, Wc1)
    out = _conv3x3_ref(_leaky(_csain_ref(out, reg, Wg2, Wb2)), Wc2)
    return out + shortcut


if __name__ == "__main__":
    key = jax.random.PRNGKey(0)
    ks = jax.random.split(key, 8)

    # in_planes == planes == 8 (identity shortcut); reg_matrix has 8 channels and
    # the gamma/beta generators map 8 -> 8 channels so the CSAIN broadcast is valid.
    N, C, H, W = 2, 8, 16, 16
    Creg = 8

    x = jax.random.normal(ks[0], (N, C, H, W), dtype=jnp.float32)
    reg = jax.random.normal(ks[1], (N, Creg, H, W), dtype=jnp.float32)

    s = 0.1
    Wg1 = s * jax.random.normal(ks[2], (C, Creg, 3, 3), dtype=jnp.float32)
    Wb1 = s * jax.random.normal(ks[3], (C, Creg, 3, 3), dtype=jnp.float32)
    Wc1 = s * jax.random.normal(ks[4], (C, C, 3, 3), dtype=jnp.float32)
    Wg2 = s * jax.random.normal(ks[5], (C, Creg, 3, 3), dtype=jnp.float32)
    Wb2 = s * jax.random.normal(ks[6], (C, Creg, 3, 3), dtype=jnp.float32)
    Wc2 = s * jax.random.normal(ks[7], (C, C, 3, 3), dtype=jnp.float32)

    out = preact_block_csain(x, reg, Wg1, Wb1, Wc1, Wg2, Wb2, Wc2)
    out = jax.block_until_ready(out)

    ref = _preact_ref(x, reg, Wg1, Wb1, Wc1, Wg2, Wb2, Wc2)
    np.testing.assert_allclose(np.asarray(out), np.asarray(ref),
                               rtol=1e-3, atol=1e-3)

    print("KERNEL_OK")
</pallas_src>

<mosaic_0001>
module attributes {stable_mosaic.version = 11 : i64} {
  func.func @_conv_kernel(%arg0: i32, %arg1: i32, %arg2: memref<32x72xf32, #tpu.memory_space<vmem>>, %arg3: memref<1x72x256xf32, #tpu.memory_space<vmem>>, %arg4: memref<1x32x256xf32, #tpu.memory_space<vmem>>) attributes {dimension_semantics = [#tpu.dimension_semantics<parallel>, #tpu.dimension_semantics<parallel>], iteration_bounds = array<i64: 2, 1>, scalar_prefetch = 0 : i64, scratch_operands = 0 : i64, tpu.core_type = #tpu.core_type<tc>, window_params = [{pipeline_mode = #tpu.pipeline_mode<synchronous>, transform_indices = @transform_0, window_bounds = array<i64: 32, 72>}, {transform_indices = @transform_1, window_bounds = array<i64: 1, 72, 256>}, {transform_indices = @transform_2, window_bounds = array<i64: 1, 32, 256>}]} {
    %c0 = arith.constant 0 : index
    %c0_0 = arith.constant 0 : index
    %0 = vector.load %arg2[%c0, %c0_0] : memref<32x72xf32, #tpu.memory_space<vmem>>, vector<32x72xf32>
    %c0_1 = arith.constant 0 : index
    %c0_2 = arith.constant 0 : index
    %c0_3 = arith.constant 0 : index
    %1 = vector.load %arg3[%c0_1, %c0_2, %c0_3] : memref<1x72x256xf32, #tpu.memory_space<vmem>>, vector<1x72x256xf32>
    %2 = vector.shape_cast %1 : vector<1x72x256xf32> to vector<72x256xf32>
    %cst = arith.constant dense<0.000000e+00> : vector<32x256xf32>
    %3 = tpu.matmul %0, %2, %cst {dimension_numbers = #tpu.dot_dimension_numbers<[1], [0], [0], [1], [0, 0, 1, 1], [], []>} : vector<32x72xf32>, vector<72x256xf32>, vector<32x256xf32> -> vector<32x256xf32>
    %cst_4 = arith.constant 0.000000e+00 : f32
    %4 = vector.broadcast %cst_4 : f32 to vector<32x256xf32>
    %5 = arith.cmpf oge, %3, %4 : vector<32x256xf32>
    %cst_5 = arith.constant 2.000000e-01 : f32
    %6 = vector.broadcast %cst_5 : f32 to vector<32x256xf32>
    %7 = arith.mulf %6, %3 : vector<32x256xf32>
    %8 = arith.select %5, %3, %7 : vector<32x256xi1>, vector<32x256xf32>
    %c0_6 = arith.constant 0 : index
    %c0_7 = arith.constant 0 : index
    %c0_8 = arith.constant 0 : index
    %9 = vector.load %arg4[%c0_6, %c0_7, %c0_8] : memref<1x32x256xf32, #tpu.memory_space<vmem>>, vector<1x32x256xf32>
    %10 = vector.shape_cast %9 : vector<1x32x256xf32> to vector<32x256xf32>
    %11 = vector.shape_cast %8 : vector<32x256xf32> to vector<1x32x256xf32>
    tpu.vector_store %arg4[%c0_6, %c0_7, %c0_8], %11 {strides = array<i32>} : memref<1x32x256xf32, #tpu.memory_space<vmem>>, vector<1x32x256xf32>,
    return
  }
  func.func @transform_0(%arg0: i32, %arg1: i32) -> (i32, i32) {
    %c0_i32 = arith.constant 0 : i32
    %c0_i32_0 = arith.constant 0 : i32
    %c0_i32_1 = arith.constant 0 : i32
    return %c0_i32, %c0_i32_0 : i32, i32
  }
  func.func @transform_1(%arg0: i32, %arg1: i32) -> (i32, i32, i32) {
    %c0_i32 = arith.constant 0 : i32
    %c0_i32_0 = arith.constant 0 : i32
    return %arg0, %c0_i32, %arg1 : i32, i32, i32
  }
  func.func @transform_2(%arg0: i32, %arg1: i32) -> (i32, i32, i32) {
    %c0_i32 = arith.constant 0 : i32
    %c0_i32_0 = arith.constant 0 : i32
    return %arg0, %c0_i32, %arg1 : i32, i32, i32
  }
}

</mosaic_0001>

<llo_original>
// kernel: tpu_custom_call.1
$region0: #{tpu_custom_call.1}
  #allocation0 [shape = 'u32[]', space=smem, size = 0x4, offset = 0x4, fixed_abs, tag = 'smem constant byte address 0x4 - core index']
  #allocation1 [shape = 'u32[144,128]{1,0:T(1,128)}', space=vmem, size = 0x12000, scoped, tag = 'internal scratch']
  %s0 = inlined_call_operand.hbm [shape: f32[32,72], index: 0, kind: input, shape index: {}]
  %s1 = inlined_call_operand.hbm [shape: f32[2,72,256], index: 1, kind: input, shape index: {}]
  %s2 = inlined_call_operand.hbm [shape: f32[2,32,256], index: 2, kind: output, shape index: {}]
  %s3 = sld [smem:[#allocation0]]
  $region49: #{tpu_custom_call.1} parent=0
    _
  %s5 = ssub.s32 1, %s3
  %s6 = scalar_select 0, %s5, %s3
  $region1: #{tpu_custom_call.1} parent=0
    #allocation2 [shape = 'u8[16384]{0}', space=vmem, size = 0x4000, scoped, tag = 'input window, operand 0, single buffered']
    #allocation3 [shape = 's32[2]{0}', space=sflag, size = 0x8, scoped, tag = 'scoped memory for tpu_custom_call.1']
    #allocation4 [shape = 's32[2]{0}', space=sflag, size = 0x8, scoped, tag = 'scoped memory for tpu_custom_call.1']
    #allocation5 [shape = 'u8[147456]{0}', space=vmem, size = 0x24000, scoped, tag = 'input window, operand 1']
    #allocation6 [shape = 's32[2]{0}', space=sflag, size = 0x8, scoped, tag = 'scoped memory for tpu_custom_call.1']
    #allocation7 [shape = 'u8[65536]{0}', space=vmem, size = 0x10000, scoped, tag = 'output window, operand 0']
    %7 = vsyncpa [#allocation3], 0
    %8 = vsyncpa [#allocation6], 0
    %s9 = scalar_lea.sflag [#allocation6], 1
    %10 = vsyncpa %s9, 0
    %11 = vsyncpa [#allocation4], 0
    %s12 = scalar_lea.sflag [#allocation4], 1
    %13 = vsyncpa %s12, 0
    loop: start=0, step=1, limit=4
    $region2: #{tpu_custom_call.1} parent=1 // loop_pre_header
      _
    $region3: #{tpu_custom_call.1} parent=1 // loop_header
      %s15 = sphi 0, %s19
      %p16 = scmp.ge.s32.totalorder %s15, 4
      %s22 = sphi 0, %s34
      %s23 = sphi 0, %s30
      %s24 = sphi 0, %s22
      %s25 = sphi 0, %s23
      %s26 = sphi 0, %s24
      %s27 = sphi 0, %s25
      %s35 = sphi 0, %s35
      %s37 = sphi 0, %s35
      %s38 = sphi 0, %s37
      %s52 = sphi 0, %s38
      %s60 = sphi 0, %s62
      %s63 = sphi 0, %s60
      %s64 = sphi 0, %s63
      %s80 = sphi 0, %s64
      %s88 = sphi 0, %s90
      %s91 = sphi 0, %s88
      %s92 = sphi 0, %s91
      %s108 = sphi 0, %s92
    $region4: #{tpu_custom_call.1} parent=1 // loop_header_branch
      %18 = sbr.rel (%p16) target = $region8
    $region5: #{tpu_custom_call.1} parent=1 // loop_body
      %s20 = ssub.s32 %s15, 1
      %s21 = ssub.s32 %s15, 2
      %s28 = sadd.s32 1, %s23
      %p29 = scmp.ge.s32.totalorder %s28, 1
      %s30 = scalar_select %p29, 0, %s28
      %s31 = sadd.s32 1, %s22
      %s32 = scalar_select %p29, %s31, %s22
      %p33 = scmp.ge.s32.totalorder %s32, 2
      %s34 = scalar_select %p33, 0, %s32
      %s36 = sadd.s32 %s35, 1
      %p39 = scmp.eq.s32.totalorder %s15, 1
      %p40 = scmp.ne.s32.totalorder %s35, %s37
      %p41 = scmp.eq.s32.totalorder %s15, 0
      %p42 = por %p40, %p41
      %p43 = scmp.ne.s32.totalorder %s35, %s37
      %p44 = scmp.eq.s32.totalorder %s20, 1
      %p45 = por %p43, %p44
      %p46 = scmp.ne.s32.totalorder %s37, %s38
      %p47 = scmp.eq.s32.totalorder %s20, 0
      %p48 = por %p46, %p47
      %p49 = scmp.ne.s32.totalorder %s37, %s38
      %p50 = scmp.eq.s32.totalorder %s21, 1
      %p51 = por %p49, %p50
      %p53 = scmp.ne.s32.totalorder %s38, %s52
      %p54 = scmp.eq.s32.totalorder %s21, 0
      %p55 = por %p53, %p54
      %s56 = ssub.s32 %s22, %s34
      %s57 = ssub.s32 %s23, %s30
      %s58 = sor.u32 %s56, %s57
      %p59 = scmp.eq.s32.totalorder %s58, 0
      %s61 = sadd.s32 %s60, 1
      %s62 = scalar_select %p59, %s60, %s61
      %p65 = pneg %p59
      %p66 = scmp.eq.s32.totalorder %s15, 1
      %p67 = por %p65, %p66
      %p68 = scmp.ne.s32.totalorder %s60, %s63
      %p69 = scmp.eq.s32.totalorder %s15, 0
      %p70 = por %p68, %p69
      %p71 = scmp.ne.s32.totalorder %s60, %s63
      %p72 = scmp.eq.s32.totalorder %s20, 1
      %p73 = por %p71, %p72
      %p74 = scmp.ne.s32.totalorder %s63, %s64
      %p75 = scmp.eq.s32.totalorder %s20, 0
      %p76 = por %p74, %p75
      %p77 = scmp.ne.s32.totalorder %s63, %s64
      %p78 = scmp.eq.s32.totalorder %s21, 1
      %p79 = por %p77, %p78
      %p81 = scmp.ne.s32.totalorder %s64, %s80
      %p82 = scmp.eq.s32.totalorder %s21, 0
      %p83 = por %p81, %p82
      %s84 = ssub.s32 %s22, %s34
      %s85 = ssub.s32 %s23, %s30
      %s86 = sor.u32 %s84, %s85
      %p87 = scmp.eq.s32.totalorder %s86, 0
      %s89 = sadd.s32 %s88, 1
      %s90 = scalar_select %p87, %s88, %s89
      %p93 = pneg %p87
      %p94 = scmp.eq.s32.totalorder %s15, 1
      %p95 = por %p93, %p94
      %p96 = scmp.ne.s32.totalorder %s88, %s91
      %p97 = scmp.eq.s32.totalorder %s15, 0
      %p98 = por %p96, %p97
      %p99 = scmp.ne.s32.totalorder %s88, %s91
      %p100 = scmp.eq.s32.totalorder %s20, 1
      %p101 = por %p99, %p100
      %p102 = scmp.ne.s32.totalorder %s91, %s92
      %p103 = scmp.eq.s32.totalorder %s20, 0
      %p104 = por %p102, %p103
      %p105 = scmp.ne.s32.totalorder %s91, %s92
      %p106 = scmp.eq.s32.totalorder %s21, 1
      %p107 = por %p105, %p106
      %p109 = scmp.ne.s32.totalorder %s92, %s108
      %p110 = scmp.eq.s32.totalorder %s21, 0
      %p111 = por %p109, %p110
      %p112 = scmp.le.s32.totalorder 1, %s15
      %p113 = scmp.lt.s32.totalorder %s15, 3
      %p114 = pnand %p112, %p113
      %p115 = pneg %p114
      // Predicated region
      $region9: #{tpu_custom_call.1} parent=5 // pred_check
        _
      $region10: #{tpu_custom_call.1} parent=5 // pred_check_branch
        %117 = sbr.rel (%p114) target = $region12
      $region11: #{tpu_custom_call.1} parent=5 // pred_region
        %s118 = ssub.s32 %s15, 1
        // Predicated region
        $region13: #{tpu_custom_call.1} parent=11 // pred_check
          %p119 = pneg %p48
        $region14: #{tpu_custom_call.1} parent=11 // pred_check_branch
          %121 = sbr.rel (%p119) target = $region16
        $region15: #{tpu_custom_call.1} parent=11 // pred_region
          %s123 = ssub.s32 512, 512
          %124 = vsyncadd [#allocation3], %s123
          %s125 = sshll.u32 [#allocation2], 4
          %s126 = int_to_ptr.vmem [resolvable:$true] %s125
          %131 = dma.hbm_to_vmem [thread:$0]  %s0, 512, %s126, [#allocation3], 128, 128, 8
        $region16: #{tpu_custom_call.1} parent=11 // pred_fallthru
          _
      $region12: #{tpu_custom_call.1} parent=5 // pred_fallthru
        _
      %p132 = scmp.lt.s32.totalorder %s15, 2
      // Predicated region
      $region17: #{tpu_custom_call.1} parent=5 // pred_check
        %p133 = pneg %p132
      $region18: #{tpu_custom_call.1} parent=5 // pred_check_branch
        %135 = sbr.rel (%p133) target = $region20
      $region19: #{tpu_custom_call.1} parent=5 // pred_region
        // Predicated region
        $region21: #{tpu_custom_call.1} parent=19 // pred_check
          %p136 = pneg %p70
        $region22: #{tpu_custom_call.1} parent=19 // pred_check_branch
          %138 = sbr.rel (%p136) target = $region24
        $region23: #{tpu_custom_call.1} parent=19 // pred_region
          %s139 = sand.u32 %s60, 1
          %s140 = scalar_lea.sflag [#allocation6], %s139
          %s141 = sand.u32 %s60, 1
          %s142 = smul.addr %s141, 144
          %s143 = scalar_lea.vmem [#allocation5], %s142
          %s144 = smul.u32 2, %s23
          %s146 = ssub.s32 2304, 2304
          %147 = vsyncadd %s140, %s146
          %s148 = smul.addr %s22, 18
          %s149 = sadd.s32 %s144, %s148
          %s150 = smul.addr %s149, 128
          %s151 = scalar_lea.hbm %s1, %s150
          %s152 = sshll.u32 %s143, 4
          %s153 = int_to_ptr.vmem [resolvable:$true] %s152
          %158 = dma.hbm_to_vmem [thread:$0]  %s151, 2304, %s153, %s140, 256, 256, 16
        $region24: #{tpu_custom_call.1} parent=19 // pred_fallthru
          _
      $region20: #{tpu_custom_call.1} parent=5 // pred_fallthru
        _
      %p159 = scmp.le.s32.totalorder 1, %s15
      %p160 = scmp.lt.s32.totalorder %s15, 3
      %p161 = pnand %p159, %p160
      %p162 = pneg %p161
      // Predicated region
      $region25: #{tpu_custom_call.1} parent=5 // pred_check
        _
      $region26: #{tpu_custom_call.1} parent=5 // pred_check_branch
        %164 = sbr.rel (%p161) target = $region28
      $region27: #{tpu_custom_call.1} parent=5 // pred_region
        %s165 = ssub.s32 %s15, 1
        // Predicated region
        $region29: #{tpu_custom_call.1} parent=27 // pred_check
          %p166 = pneg %p48
        $region30: #{tpu_custom_call.1} parent=27 // pred_check_branch
          %168 = sbr.rel (%p166) target = $region32
        $region31: #{tpu_custom_call.1} parent=27 // pred_region
          %169 = dma.done [#allocation3], 512
        $region32: #{tpu_custom_call.1} parent=27 // pred_fallthru
          _
        %s170 = sand.u32 %s63, 1
        %s171 = scalar_lea.sflag [#allocation6], %s170
        %s172 = sand.u32 %s63, 1
        %s173 = smul.addr %s172, 144
        %s174 = scalar_lea.vmem [#allocation5], %s173
        // Predicated region
        $region33: #{tpu_custom_call.1} parent=27 // pred_check
          %p175 = pneg %p76
        $region34: #{tpu_custom_call.1} parent=27 // pred_check_branch
          %177 = sbr.rel (%p175) target = $region36
        $region35: #{tpu_custom_call.1} parent=27 // pred_region
          %178 = dma.done %s171, 2304
        $region36: #{tpu_custom_call.1} parent=27 // pred_fallthru
          _
        %p179 = pneg %p48
        %p180 = pneg %p45
        %s181 = sand.u32 %s63, 1
        %s182 = scalar_lea.sflag [#allocation6], %s181
        %s183 = sand.u32 %s63, 1
        %s184 = smul.addr %s183, 144
        %s185 = scalar_lea.vmem [#allocation5], %s184
        %p186 = pneg %p76
        %p187 = pneg %p73
        %p188 = pneg %p104
        %p189 = pneg %p101
        %s190 = sand.u32 %s91, 1
        %s191 = scalar_lea.sflag [#allocation4], %s190
        %s192 = sand.u32 %s91, 1
        %s193 = smul.addr %s192, 64
        %s194 = scalar_lea.vmem [#allocation7], %s193
        %s195 = smul.u32 2, %s25
        %s196 = smul.u32 2, %s25
        %v197 = vld [vmem:[#allocation2] sm:$0xff]
        %v198 = vld [vmem:[#allocation2 + $0x8] sm:$0xff]
        %v199 = vld [vmem:[#allocation2 + $0x10] sm:$0xff]
        %v200 = vld [vmem:[#allocation2 + $0x18] sm:$0xff]
        %v201 = vld [vmem:[%s174] sm:$0xff]
        %v202 = vld [vmem:[%s174 + $0x8] sm:$0xff]
        %v203 = vld [vmem:[%s174 + $0x10] sm:$0xff]
        %v204 = vld [vmem:[%s174 + $0x18] sm:$0xff]
        %v205 = vld [vmem:[%s174 + $0x20] sm:$0xff]
        %v206 = vld [vmem:[%s174 + $0x28] sm:$0xff]
        %v207 = vld [vmem:[%s174 + $0x30] sm:$0xff]
        %v208 = vld [vmem:[%s174 + $0x38] sm:$0xff]
        %v209 = vld [vmem:[%s174 + $0x40] sm:$0xff]
        %v210 = vld [vmem:[%s174 + $0x48] sm:$0xff]
        %v211 = vld [vmem:[%s174 + $0x50] sm:$0xff]
        %v212 = vld [vmem:[%s174 + $0x58] sm:$0xff]
        %v213 = vld [vmem:[%s174 + $0x60] sm:$0xff]
        %v214 = vld [vmem:[%s174 + $0x68] sm:$0xff]
        %v215 = vld [vmem:[%s174 + $0x70] sm:$0xff]
        %v216 = vld [vmem:[%s174 + $0x78] sm:$0xff]
        %v217 = vld [vmem:[%s174 + $0x80] sm:$0xff]
        %v218 = vld [vmem:[%s174 + $0x88] sm:$0xff]
        %vm219 = vcmask 588800
        %v221 = vsel %vm219, %v197, 0
        %v224 = vsel %vm219, %v198, 0
        %v227 = vsel %vm219, %v199, 0
        %v230 = vsel %vm219, %v200, 0
        %232 = vmatprep.subr.mxu0 %v202
        %233 = vmatpush1.msra.mxu0 %v201
        %234 = vmatprep.subr.mxu0 %v204
        %235 = vmatpush1.msra.mxu0 %v203
        %236 = vmatprep.subr.mxu0 %v206
        %237 = vmatpush1.msra.mxu0 %v205
        %238 = vmatprep.subr.mxu0 %v208
        %239 = vmatpush1.msra.mxu0 %v207
        %240 = vmatprep.subr.mxu0 %v210
        %241 = vmatpush1.msra.mxu0 %v209
        %242 = vmatprep.subr.mxu0 %v212
        %243 = vmatpush1.msra.mxu0 %v211
        %244 = vmatprep.subr.mxu0 %v214
        %245 = vmatpush1.msra.mxu0 %v213
        %246 = vmatprep.subr.mxu0 %v216
        %247 = vmatpush1.msra.mxu0 %v215
        %248 = vmatprep.subr.mxu0 %v218
        %249 = vmatpush1.msra.mxu0 %v217
        %250 = vmatprep.subr.mxu0 0.0
        %251 = vmatpush1.msra.mxu0 0.0
        %252 = vmatprep.subr.mxu0 0.0
        %253 = vmatpush1.msra.mxu0 0.0
        %254 = vmatprep.subr.mxu0 0.0
        %255 = vmatpush1.msra.mxu0 0.0
        %256 = vmatprep.subr.mxu0 0.0
        %257 = vmatpush1.msra.mxu0 0.0
        %258 = vmatprep.subr.mxu0 0.0
        %259 = vmatpush1.msra.mxu0 0.0
        %260 = vmatprep.subr.mxu0 0.0
        %261 = vmatpush1.msra.mxu0 0.0
        %262 = vmatprep.subr.mxu0 0.0
        %263 = vmatpush1.msra.mxu0 0.0
        %264 = vmatprep.subr.mxu0 0.0
        %265 = vmatpush1.msra.mxu0 0.0
        %266 = vmatprep.subr.mxu0 0.0
        %267 = vmatpush1.msra.mxu0 0.0
        %268 = vmatprep.subr.mxu0 0.0
        %269 = vmatpush1.msra.mxu0 0.0
        %270 = vmatprep.subr.mxu0 0.0
        %271 = vmatpush1.msra.mxu0 0.0
        %272 = vmatprep.subr.mxu0 0.0
        %273 = vmatpush1.msra.mxu0 0.0
        %274 = vmatprep.subr.mxu0 0.0
        %275 = vmatpush1.msra.mxu0 0.0
        %276 = vmatprep.subr.mxu0 0.0
        %277 = vmatpush1.msra.mxu0 0.0
        %278 = vmatprep.subr.mxu0 0.0
        %279 = vmatpush1.msra.mxu0 0.0
        %280 = vmatprep.subr.mxu0 0.0
        %281 = vmatpush1.msra.mxu0 0.0
        %282 = vmatprep.subr.mxu0 0.0
        %283 = vmatpush1.msra.mxu0 0.0
        %284 = vmatprep.subr.mxu0 0.0
        %285 = vmatpush1.msra.mxu0 0.0
        %286 = vmatprep.subr.mxu0 0.0
        %287 = vmatpush1.msra.mxu0 0.0
        %288 = vmatprep.subr.mxu0 0.0
        %289 = vmatpush1.msra.mxu0 0.0
        %290 = vmatprep.subr.mxu0 0.0
        %291 = vmatpush1.msra.mxu0 0.0
        %292 = vmatprep.subr.mxu0 0.0
        %293 = vmatpush1.msra.mxu0 0.0
        %294 = vmatprep.subr.mxu0 0.0
        %295 = vmatpush1.msra.mxu0 0.0
        %296 = vmatprep.mubr.f32.mxu0 0.0
        %297 = vmatmul.mubr.f32.gmra.mrb[0].mxu0 %v221
        %v298 = vpop.f32.mrb[0].mxu0
        %v299 = vadd.f32 0.0, %v298
        %v300 = vpop.f32.mrb[0].mxu0
        %v301 = vadd.f32 0.0, %v300
        %302 = vmatprep.mubr.f32.mxu0 0.0
        %303 = vmatmul.mubr.f32.gmra.mrb[0].mxu0 %v224
        %v304 = vpop.f32.mrb[0].mxu0
        %v305 = vadd.f32 0.0, %v304
        %v306 = vpop.f32.mrb[0].mxu0
        %v307 = vadd.f32 0.0, %v306
        %308 = vmatprep.mubr.f32.mxu0 0.0
        %309 = vmatmul.mubr.f32.gmra.mrb[0].mxu0 %v227
        %v310 = vpop.f32.mrb[0].mxu0
        %v311 = vadd.f32 0.0, %v310
        %v312 = vpop.f32.mrb[0].mxu0
        %v313 = vadd.f32 0.0, %v312
        %314 = vmatprep.mubr.f32.mxu0 0.0
        %315 = vmatmul.mubr.f32.gmra.mrb[0].mxu0 %v230
        %v316 = vpop.f32.mrb[0].mxu0
        %v317 = vadd.f32 0.0, %v316
        %v318 = vpop.f32.mrb[0].mxu0
        %v319 = vadd.f32 0.0, %v318
        %320 = vdwg.mxu0
        %vm321 = vcmp.ge.f32.partialorder %v299, 0.0
        %vm322 = vcmp.ge.f32.partialorder %v301, 0.0
        %vm323 = vcmp.ge.f32.partialorder %v305, 0.0
        %vm324 = vcmp.ge.f32.partialorder %v307, 0.0
        %vm325 = vcmp.ge.f32.partialorder %v311, 0.0
        %vm326 = vcmp.ge.f32.partialorder %v313, 0.0
        %vm327 = vcmp.ge.f32.partialorder %v317, 0.0
        %vm328 = vcmp.ge.f32.partialorder %v319, 0.0
        %v329 = vmul.f32 %v299, 0.2
        %v330 = vmul.f32 %v301, 0.2
        %v331 = vmul.f32 %v305, 0.2
        %v332 = vmul.f32 %v307, 0.2
        %v333 = vmul.f32 %v311, 0.2
        %v334 = vmul.f32 %v313, 0.2
        %v335 = vmul.f32 %v317, 0.2
        %v336 = vmul.f32 %v319, 0.2
        %v337 = vsel %vm321, %v299, %v329
        %v338 = vsel %vm322, %v301, %v330
        %v339 = vsel %vm323, %v305, %v331
        %v340 = vsel %vm324, %v307, %v332
        %v341 = vsel %vm325, %v311, %v333
        %v342 = vsel %vm326, %v313, %v334
        %v343 = vsel %vm327, %v317, %v335
        %v344 = vsel %vm328, %v319, %v336
        %345 = vst [vmem:[%s194] sm:$0xff] %v337
        %346 = vst [vmem:[%s194 + $0x8] sm:$0xff] %v338
        %347 = vst [vmem:[%s194 + $0x10] sm:$0xff] %v339
        %348 = vst [vmem:[%s194 + $0x18] sm:$0xff] %v340
        %349 = vst [vmem:[%s194 + $0x20] sm:$0xff] %v341
        %350 = vst [vmem:[%s194 + $0x28] sm:$0xff] %v342
        %351 = vst [vmem:[%s194 + $0x30] sm:$0xff] %v343
        %352 = vst [vmem:[%s194 + $0x38] sm:$0xff] %v344
        %s353 = sand.u32 %s91, 1
        %s354 = scalar_lea.sflag [#allocation4], %s353
        %s355 = sand.u32 %s91, 1
        %s356 = smul.addr %s355, 64
        %s357 = scalar_lea.vmem [#allocation7], %s356
        // Predicated region
        $region37: #{tpu_custom_call.1} parent=27 // pred_check
          %p358 = pneg %p101
        $region38: #{tpu_custom_call.1} parent=27 // pred_check_branch
          %360 = sbr.rel (%p358) target = $region40
        $region39: #{tpu_custom_call.1} parent=27 // pred_region
          %s361 = smul.u32 2, %s25
          %s363 = ssub.s32 1024, 1024
          %364 = vsyncadd %s354, %s363
          %s365 = smul.addr %s24, 8
          %s366 = sadd.s32 %s361, %s365
          %s367 = smul.addr %s366, 128
          %s368 = scalar_lea.hbm %s2, %s367
          %s369 = sshll.u32 %s357, 4
          %s370 = int_to_ptr.vmem [resolvable:$true] %s369
          %375 = dma.vmem_to_hbm [thread:$0]  %s370, 1024, %s368, %s354, 256, 256, 16
        $region40: #{tpu_custom_call.1} parent=27 // pred_fallthru
          _
      $region28: #{tpu_custom_call.1} parent=5 // pred_fallthru
        _
      %p376 = scmp.le.s32.totalorder 2, %s15
      // Predicated region
      $region41: #{tpu_custom_call.1} parent=5 // pred_check
        %p377 = pneg %p376
      $region42: #{tpu_custom_call.1} parent=5 // pred_check_branch
        %379 = sbr.rel (%p377) target = $region44
      $region43: #{tpu_custom_call.1} parent=5 // pred_region
        %s380 = ssub.s32 %s15, 2
        // Predicated region
        $region45: #{tpu_custom_call.1} parent=43 // pred_check
          %p381 = pneg %p107
        $region46: #{tpu_custom_call.1} parent=43 // pred_check_branch
          %383 = sbr.rel (%p381) target = $region48
        $region47: #{tpu_custom_call.1} parent=43 // pred_region
          %s384 = sand.u32 %s92, 1
          %s385 = scalar_lea.sflag [#allocation4], %s384
          %s386 = sand.u32 %s92, 1
          %s387 = smul.addr %s386, 64
          %s388 = scalar_lea.vmem [#allocation7], %s387
          %389 = dma.done %s385, 1024
        $region48: #{tpu_custom_call.1} parent=43 // pred_fallthru
          _
      $region44: #{tpu_custom_call.1} parent=5 // pred_fallthru
        _
    $region6: #{tpu_custom_call.1} parent=1 // loop_footer
      %s19 = sadd.s32 1, %s15
    $region7: #{tpu_custom_call.1} parent=1 // loop_footer_branch
      %14 = sbr.rel target = $region3
    $region8: #{tpu_custom_call.1} parent=1 // loop_exit
      _
    %390 = vsyncpa [#allocation3], 1
    %s391 = scalar_lea.sflag [#allocation3], 1
    %392 = vsyncpa %s391, 1
    %393 = vsyncpa [#allocation6], 1
    %s394 = scalar_lea.sflag [#allocation6], 1
    %395 = vsyncpa %s394, 1
    %396 = vsyncpa [#allocation4], 1
    %s397 = scalar_lea.sflag [#allocation4], 1
    %398 = vsyncpa %s397, 1

</llo_original>
